<compile_context>
chip_gen: v7x
topology: tpu7x:2x2x1
jax: 0.10.0
libtpu: 0.0.40
codegen_flags: <defaults>
</compile_context>

<pallas_src>
import functools
import math

import jax
import jax.numpy as jnp
from jax import lax
from jax.experimental import pallas as pl
from jax.experimental.pallas import tpu as pltpu


def _attention_kernel(q_ref, k_ref, wq_ref, bq_ref, wk_ref, bk_ref,
                      out_ref, score_ref, kx_ref, *, n_head, hidden_dim):
    # q_ref:     (1, TQ, E)            k_ref:     (1, k_len, E)
    # wq_ref:    (E, n_head*hd)        bq_ref:    (1, n_head*hd)   (same for wk/bk)
    # out_ref:   (1, TQ, n_head*hd)    score_ref: (n_head, 1, TQ, k_len)
    # kx_ref:    VMEM scratch (k_len, n_head*hd) -- K projection, reused across q tiles
    hd = hidden_dim
    t = pl.program_id(1)

    @pl.when(t == 0)
    def _():
        # Fused K projection for all heads at once: (k_len, E) @ (E, n_head*hd).
        kx_f32 = (jnp.dot(k_ref[0], wk_ref[...],
                          preferred_element_type=jnp.float32)
                  + bk_ref[...])
        kx_ref[...] = kx_f32.astype(kx_ref.dtype)

    # Fused Q projection for this q tile: (TQ, E) @ (E, n_head*hd), f32 accumulation.
    qx_f32 = (jnp.dot(q_ref[0], wq_ref[...], preferred_element_type=jnp.float32)
              + bq_ref[...])
    qx = qx_f32.astype(kx_ref.dtype)      # matmul-operand dtype (f32 or bf16)
    kx = kx_ref[...]

    # Static unroll over heads (n_head is small and compile-time constant).
    # (For large n_head, switch to lax.fori_loop(..., unroll=True) to bound live ranges.)
    for h in range(n_head):
        qx_h = qx[:, h * hd:(h + 1) * hd]          # (TQ, hd)     static lane slice
        kx_h = kx[:, h * hd:(h + 1) * hd]          # (k_len, hd)

        # dot_product score: qx_h @ kx_h^T without an explicit transpose (MXU, f32 acc).
        s = lax.dot_general(qx_h, kx_h,
                            dimension_numbers=(((1,), (1,)), ((), ())),
                            preferred_element_type=jnp.float32)      # (TQ, k_len)

        # Numerically stable softmax over the last axis -- strictly f32, EXACT divide
        # (score is an externally visible output; approx reciprocal drifted > 1e-3).
        s_max = jnp.max(s, axis=-1, keepdims=True)
        e = jnp.exp(s - s_max)
        denom = jnp.sum(e, axis=-1, keepdims=True)
        p = e / denom                                                # (TQ, k_len), f32

        # Attention output for this head: score @ kx_h (bf16 operands on the fast path,
        # f32 accumulation).
        o = jnp.dot(p.astype(kx_h.dtype), kx_h,
                    preferred_element_type=jnp.float32)              # (TQ, hd)

        # Write output directly in its final layout (head h -> lanes [h*hd:(h+1)*hd]).
        out_ref[0, :, h * hd:(h + 1) * hd] = o.astype(out_ref.dtype)
        score_ref[h, 0] = p.astype(score_ref.dtype)


def _pick_q_tile(q_len, k_len, E, H, n_head, operand_itemsize,
                 vmem_budget_bytes):
    """Largest q tile whose per-step VMEM footprint fits the budget.

    Footprint model: double-buffered q / k / out / score blocks + fused weights
    (double-buffered by the default pipeline) + the kx scratch.
    """
    f32 = 4

    def footprint(tq):
        score_blk = 2 * n_head * tq * k_len * f32          # score output block
        out_blk = 2 * tq * H * f32                          # attention output block
        q_blk = 2 * tq * E * operand_itemsize               # q input block
        k_blk = 2 * k_len * E * operand_itemsize            # k input block (grid-constant)
        w_blk = 2 * 2 * E * H * operand_itemsize            # Wq + Wk
        kx_scratch = k_len * H * operand_itemsize           # cached K projection
        return score_blk + out_blk + q_blk + k_blk + w_blk + kx_scratch

    # Candidate tiles: divisors of q_len that are multiples of 8 (sublane-aligned),
    # plus q_len itself (a full-extent block is always layout-legal).
    cands = sorted({d for d in range(8, q_len + 1, 8) if q_len % d == 0} | {q_len},
                   reverse=True)
    budget = int(0.6 * vmem_budget_bytes)   # leave headroom for compiler scratch
    tq = cands[-1]
    for c in cands:
        if footprint(c) <= budget:
            tq = c
            break
    return tq, footprint(tq)


def attention_forward(k, q, params, n_head, hidden_dim,
                      compute_dtype=jnp.float32,
                      vmem_budget_bytes=64 * 1024 * 1024):
    """Mirrors Attention.forward(k, q) with score_fn='dot_product', dropout=0.

    k: (B, k_len, E) float32
    q: (B, q_len, E) float32
    compute_dtype: matmul operand dtype (jnp.float32 exact, jnp.bfloat16 fast path
                   for v6e/v7x MXUs; accumulation and softmax are always f32).
    Returns (output, score):
      output: (B, q_len, n_head * hidden_dim)   float32
      score:  (n_head * B, q_len, k_len)        float32 (head-major, as in torch)
    """
    if k.ndim == 2:
        k = k[:, None, :]
    if q.ndim == 2:
        q = q[:, None, :]
    assert k.shape[0] == q.shape[0], "key_batch_size doesn't match query_batch_size"
    B, k_len, E = k.shape
    _, q_len, _ = q.shape
    hd = hidden_dim
    H = n_head * hd

    # torch Linear: y = x @ W.T + b with W of shape (n_head*hd, E).
    # Keep the transposed weight as a single fused (E, n_head*hd) operand.
    wq_t = params["wq"].T.astype(compute_dtype)          # (E, n_head*hd)
    wk_t = params["wk"].T.astype(compute_dtype)
    bq = params["bq"].reshape(1, H).astype(jnp.float32)  # biases stay f32 (added post-MXU)
    bk = params["bk"].reshape(1, H).astype(jnp.float32)
    q_op = q.astype(compute_dtype)
    k_op = k.astype(compute_dtype)
    itemsize = jnp.dtype(compute_dtype).itemsize

    # VMEM-aware q tile (budget is the tightest generation, v7x @ 64 MiB per TC).
    TQ, step_footprint = _pick_q_tile(q_len, k_len, E, H, n_head, itemsize,
                                      vmem_budget_bytes)
    assert q_len % TQ == 0
    n_q_tiles = q_len // TQ
    grid = (B, n_q_tiles)

    # Explicit scoped-VMEM limit derived from the actual footprint (clamped so it is
    # valid on every generation: >= default 32 MiB, <= v7x physical 64 MiB).
    vmem_limit = int(min(max(step_footprint + (16 << 20), 32 << 20), 64 << 20))

    kernel = functools.partial(_attention_kernel, n_head=n_head, hidden_dim=hd)

    out, score = pl.pallas_call(
        kernel,
        out_shape=(
            # Output already in its final (B, q_len, n_head*hd) layout.
            jax.ShapeDtypeStruct((B, q_len, H), jnp.float32),
            # (n_head, B, q_len, k_len): reshape to (n_head*B, ...) is free.
            jax.ShapeDtypeStruct((n_head, B, q_len, k_len), jnp.float32),
        ),
        grid_spec=pltpu.PrefetchScalarGridSpec(
            num_scalar_prefetch=0,
            grid=grid,
            in_specs=[
                pl.BlockSpec((1, TQ, E), lambda b, t: (b, t, 0)),      # q (tiled)
                pl.BlockSpec((1, k_len, E), lambda b, t: (b, 0, 0)),   # k (per-batch)
                pl.BlockSpec((E, H), lambda b, t: (0, 0)),             # Wq (fused heads)
                pl.BlockSpec((1, H), lambda b, t: (0, 0)),             # bq
                pl.BlockSpec((E, H), lambda b, t: (0, 0)),             # Wk
                pl.BlockSpec((1, H), lambda b, t: (0, 0)),             # bk
            ],
            out_specs=[
                pl.BlockSpec((1, TQ, H), lambda b, t: (b, t, 0)),
                pl.BlockSpec((n_head, 1, TQ, k_len), lambda b, t: (0, b, t, 0)),
            ],
            scratch_shapes=[
                pltpu.VMEM((k_len, H), compute_dtype),   # cached K projection
            ],
        ),
        compiler_params=pltpu.CompilerParams(
            # batch axis shards across TensorCores; q-tile axis carries the kx
            # scratch dependency -> arbitrary.
            dimension_semantics=("parallel", "arbitrary"),
            vmem_limit_bytes=vmem_limit),
    )(q_op, k_op, wq_t, bq, wk_t, bk)

    # torch score shape is (n_head*B, q_len, k_len), head-major -> free reshape.
    score = score.reshape(n_head * B, q_len, k_len)
    # dropout(p=0) is identity; self.projection is never applied in forward().
    return out, score


def init_params(key, embed_dim, n_head, hidden_dim):
    """Deterministic init mimicking torch.nn.Linear default (uniform +/- 1/sqrt(fan_in))."""
    bound = 1.0 / math.sqrt(embed_dim)
    k1, k2, k3, k4 = jax.random.split(key, 4)
    shape_w = (n_head * hidden_dim, embed_dim)   # torch Linear weight shape
    return {
        "wq": jax.random.uniform(k1, shape_w, jnp.float32, -bound, bound),
        "bq": jax.random.uniform(k2, (n_head * hidden_dim,), jnp.float32, -bound, bound),
        "wk": jax.random.uniform(k3, shape_w, jnp.float32, -bound, bound),
        "bk": jax.random.uniform(k4, (n_head * hidden_dim,), jnp.float32, -bound, bound),
    }


def reference_forward(k, q, params, n_head, hidden_dim):
    """Pure-JAX reference of the PyTorch forward (dot_product, dropout=0)."""
    B, k_len, E = k.shape
    _, q_len, _ = q.shape
    hd = hidden_dim
    kx = jnp.einsum("ble,oe->blo", k, params["wk"]) + params["bk"]
    qx = jnp.einsum("ble,oe->blo", q, params["wq"]) + params["bq"]
    kx = kx.reshape(B, k_len, n_head, hd).transpose(2, 0, 1, 3).reshape(-1, k_len, hd)
    qx = qx.reshape(B, q_len, n_head, hd).transpose(2, 0, 1, 3).reshape(-1, q_len, hd)
    score = jnp.einsum("bqd,bkd->bqk", qx, kx)
    score = jax.nn.softmax(score, axis=-1)
    out = jnp.einsum("bqk,bkd->bqd", score, kx)
    out = jnp.concatenate(jnp.split(out, n_head, axis=0), axis=-1)
    return out, score


if __name__ == "__main__":
    # Small, deterministic example consistent with the module's forward.
    embed_dim = 32
    n_head = 2
    hidden_dim = embed_dim // n_head   # default: embed_dim // n_head = 16
    B, q_len, k_len = 2, 8, 8

    key = jax.random.PRNGKey(0)
    pk, kk, kq = jax.random.split(key, 3)
    params = init_params(pk, embed_dim, n_head, hidden_dim)
    k_in = jax.random.normal(kk, (B, k_len, embed_dim), jnp.float32)
    q_in = jax.random.normal(kq, (B, q_len, embed_dim), jnp.float32)

    ref_out, ref_score = reference_forward(k_in, q_in, params, n_head, hidden_dim)

    # Exact (f32) path -- must match the pure-JAX reference tightly.
    out, score = attention_forward(k_in, q_in, params, n_head, hidden_dim)
    out = jax.block_until_ready(out)
    score = jax.block_until_ready(score)
    assert out.shape == (B, q_len, n_head * hidden_dim)
    assert score.shape == (n_head * B, q_len, k_len)
    assert jnp.allclose(out, ref_out, atol=2e-3, rtol=2e-3)
    assert jnp.allclose(score, ref_score, atol=2e-3, rtol=2e-3)

    # bf16 MXU-operand fast path (v6e/v7x) -- same kernel, looser tolerance by design.
    out_bf, score_bf = attention_forward(k_in, q_in, params, n_head, hidden_dim,
                                         compute_dtype=jnp.bfloat16)
    out_bf = jax.block_until_ready(out_bf)
    score_bf = jax.block_until_ready(score_bf)
    assert jnp.allclose(out_bf, ref_out, atol=5e-2, rtol=5e-2)
    assert jnp.allclose(score_bf, ref_score, atol=5e-2, rtol=5e-2)

    print("KERNEL_OK")
</pallas_src>

<mosaic_0001>
module attributes {stable_mosaic.version = 11 : i64} {
  func.func @_attention_kernel(%arg0: i32, %arg1: i32, %arg2: memref<1x8x32xf32, #tpu.memory_space<vmem>>, %arg3: memref<1x8x32xf32, #tpu.memory_space<vmem>>, %arg4: memref<32x32xf32, #tpu.memory_space<vmem>>, %arg5: memref<1x32xf32, #tpu.memory_space<vmem>>, %arg6: memref<32x32xf32, #tpu.memory_space<vmem>>, %arg7: memref<1x32xf32, #tpu.memory_space<vmem>>, %arg8: memref<1x8x32xf32, #tpu.memory_space<vmem>>, %arg9: memref<2x1x8x8xf32, #tpu.memory_space<vmem>>, %arg10: memref<8x32xf32, #tpu.memory_space<vmem>>) attributes {dimension_semantics = [#tpu.dimension_semantics<parallel>, #tpu.dimension_semantics<arbitrary>], iteration_bounds = array<i64: 2, 1>, scalar_prefetch = 0 : i64, scratch_operands = 1 : i64, tpu.core_type = #tpu.core_type<tc>, window_params = [{transform_indices = @transform_0, window_bounds = array<i64: 1, 8, 32>}, {transform_indices = @transform_1, window_bounds = array<i64: 1, 8, 32>}, {pipeline_mode = #tpu.pipeline_mode<synchronous>, transform_indices = @transform_2, window_bounds = array<i64: 32, 32>}, {pipeline_mode = #tpu.pipeline_mode<synchronous>, transform_indices = @transform_3, window_bounds = array<i64: 1, 32>}, {pipeline_mode = #tpu.pipeline_mode<synchronous>, transform_indices = @transform_4, window_bounds = array<i64: 32, 32>}, {pipeline_mode = #tpu.pipeline_mode<synchronous>, transform_indices = @transform_5, window_bounds = array<i64: 1, 32>}, {transform_indices = @transform_6, window_bounds = array<i64: 1, 8, 32>}, {transform_indices = @transform_7, window_bounds = array<i64: 2, 1, 8, 8>}]} {
    %c0_i32 = arith.constant 0 : i32
    %0 = arith.cmpi eq, %arg1, %c0_i32 : i32
    %1 = arith.extui %0 : i1 to i32
    %c0_i32_0 = arith.constant 0 : i32
    %2 = arith.cmpi ne, %1, %c0_i32_0 : i32
    scf.if %2 {
      %c0_29 = arith.constant 0 : index
      %c0_30 = arith.constant 0 : index
      %c0_31 = arith.constant 0 : index
      %49 = vector.load %arg3[%c0_29, %c0_30, %c0_31] : memref<1x8x32xf32, #tpu.memory_space<vmem>>, vector<1x8x32xf32>
      %50 = vector.shape_cast %49 : vector<1x8x32xf32> to vector<8x32xf32>
      %c0_32 = arith.constant 0 : index
      %c0_33 = arith.constant 0 : index
      %51 = vector.load %arg6[%c0_32, %c0_33] : memref<32x32xf32, #tpu.memory_space<vmem>>, vector<32x32xf32>
      %cst_34 = arith.constant dense<0.000000e+00> : vector<8x32xf32>
      %52 = tpu.matmul %50, %51, %cst_34 {dimension_numbers = #tpu.dot_dimension_numbers<[1], [0], [0], [1], [0, 0, 1, 1], [], []>} : vector<8x32xf32>, vector<32x32xf32>, vector<8x32xf32> -> vector<8x32xf32>
      %c0_35 = arith.constant 0 : index
      %c0_36 = arith.constant 0 : index
      %53 = vector.load %arg7[%c0_35, %c0_36] : memref<1x32xf32, #tpu.memory_space<vmem>>, vector<1x32xf32>
      %54 = vector.broadcast %53 : vector<1x32xf32> to vector<8x32xf32>
      %55 = arith.addf %52, %54 : vector<8x32xf32>
      %c0_37 = arith.constant 0 : index
      %c0_38 = arith.constant 0 : index
      %56 = vector.load %arg10[%c0_37, %c0_38] : memref<8x32xf32, #tpu.memory_space<vmem>>, vector<8x32xf32>
      tpu.vector_store %arg10[%c0_37, %c0_38], %55 {strides = array<i32>} : memref<8x32xf32, #tpu.memory_space<vmem>>, vector<8x32xf32>,
    } else {
    }
    %c0 = arith.constant 0 : index
    %c0_1 = arith.constant 0 : index
    %c0_2 = arith.constant 0 : index
    %3 = vector.load %arg2[%c0, %c0_1, %c0_2] : memref<1x8x32xf32, #tpu.memory_space<vmem>>, vector<1x8x32xf32>
    %4 = vector.shape_cast %3 : vector<1x8x32xf32> to vector<8x32xf32>
    %c0_3 = arith.constant 0 : index
    %c0_4 = arith.constant 0 : index
    %5 = vector.load %arg4[%c0_3, %c0_4] : memref<32x32xf32, #tpu.memory_space<vmem>>, vector<32x32xf32>
    %cst = arith.constant dense<0.000000e+00> : vector<8x32xf32>
    %6 = tpu.matmul %4, %5, %cst {dimension_numbers = #tpu.dot_dimension_numbers<[1], [0], [0], [1], [0, 0, 1, 1], [], []>} : vector<8x32xf32>, vector<32x32xf32>, vector<8x32xf32> -> vector<8x32xf32>
    %c0_5 = arith.constant 0 : index
    %c0_6 = arith.constant 0 : index
    %7 = vector.load %arg5[%c0_5, %c0_6] : memref<1x32xf32, #tpu.memory_space<vmem>>, vector<1x32xf32>
    %8 = vector.broadcast %7 : vector<1x32xf32> to vector<8x32xf32>
    %9 = arith.addf %6, %8 : vector<8x32xf32>
    %c0_7 = arith.constant 0 : index
    %c0_8 = arith.constant 0 : index
    %10 = vector.load %arg10[%c0_7, %c0_8] : memref<8x32xf32, #tpu.memory_space<vmem>>, vector<8x32xf32>
    %11 = vector.extract_strided_slice %9 {offsets = [0, 0], sizes = [8, 16], strides = [1, 1]} : vector<8x32xf32> to vector<8x16xf32>
    %12 = vector.extract_strided_slice %10 {offsets = [0, 0], sizes = [8, 16], strides = [1, 1]} : vector<8x32xf32> to vector<8x16xf32>
    %cst_9 = arith.constant dense<0.000000e+00> : vector<8x8xf32>
    %13 = tpu.matmul %11, %12, %cst_9 {dimension_numbers = #tpu.dot_dimension_numbers<[1], [1], [0], [0], [0, 0, 1, 0], [], []>} : vector<8x16xf32>, vector<8x16xf32>, vector<8x8xf32> -> vector<8x8xf32>
    %cst_10 = arith.constant dense<0xFF800000> : vector<8xf32>
    %14 = vector.multi_reduction <maximumf>, %13, %cst_10 [1] : vector<8x8xf32> to vector<8xf32>
    %15 = vector.shape_cast %14 : vector<8xf32> to vector<8x1xf32>
    %16 = vector.broadcast %15 : vector<8x1xf32> to vector<8x8xf32>
    %17 = arith.subf %13, %16 : vector<8x8xf32>
    %18 = math.exp %17 : vector<8x8xf32>
    %cst_11 = arith.constant dense<0.000000e+00> : vector<8xf32>
    %19 = vector.multi_reduction <add>, %18, %cst_11 [1] : vector<8x8xf32> to vector<8xf32>
    %20 = vector.shape_cast %19 : vector<8xf32> to vector<8x1xf32>
    %21 = vector.broadcast %20 : vector<8x1xf32> to vector<8x8xf32>
    %22 = arith.divf %18, %21 : vector<8x8xf32>
    %cst_12 = arith.constant dense<0.000000e+00> : vector<8x16xf32>
    %23 = tpu.matmul %22, %12, %cst_12 {dimension_numbers = #tpu.dot_dimension_numbers<[1], [0], [0], [1], [0, 0, 1, 1], [], []>} : vector<8x8xf32>, vector<8x16xf32>, vector<8x16xf32> -> vector<8x16xf32>
    %c0_13 = arith.constant 0 : index
    %c0_14 = arith.constant 0 : index
    %c0_15 = arith.constant 0 : index
    %24 = vector.load %arg8[%c0_13, %c0_14, %c0_15] : memref<1x8x32xf32, #tpu.memory_space<vmem>>, vector<1x8x16xf32>
    %25 = vector.shape_cast %24 : vector<1x8x16xf32> to vector<8x16xf32>
    %26 = vector.shape_cast %23 : vector<8x16xf32> to vector<1x8x16xf32>
    tpu.vector_store %arg8[%c0_13, %c0_14, %c0_15], %26 {strides = array<i32>} : memref<1x8x32xf32, #tpu.memory_space<vmem>>, vector<1x8x16xf32>,
    %c0_16 = arith.constant 0 : index
    %c0_17 = arith.constant 0 : index
    %c0_18 = arith.constant 0 : index
    %c0_19 = arith.constant 0 : index
    %27 = vector.load %arg9[%c0_16, %c0_17, %c0_18, %c0_19] : memref<2x1x8x8xf32, #tpu.memory_space<vmem>>, vector<1x1x8x8xf32>
    %28 = vector.shape_cast %27 : vector<1x1x8x8xf32> to vector<8x8xf32>
    %29 = vector.shape_cast %22 : vector<8x8xf32> to vector<1x1x8x8xf32>
    tpu.vector_store %arg9[%c0_16, %c0_17, %c0_18, %c0_19], %29 {strides = array<i32>} : memref<2x1x8x8xf32, #tpu.memory_space<vmem>>, vector<1x1x8x8xf32>,
    %30 = vector.extract_strided_slice %9 {offsets = [0, 16], sizes = [8, 16], strides = [1, 1]} : vector<8x32xf32> to vector<8x16xf32>
    %31 = vector.extract_strided_slice %10 {offsets = [0, 16], sizes = [8, 16], strides = [1, 1]} : vector<8x32xf32> to vector<8x16xf32>
    %cst_20 = arith.constant dense<0.000000e+00> : vector<8x8xf32>
    %32 = tpu.matmul %30, %31, %cst_20 {dimension_numbers = #tpu.dot_dimension_numbers<[1], [1], [0], [0], [0, 0, 1, 0], [], []>} : vector<8x16xf32>, vector<8x16xf32>, vector<8x8xf32> -> vector<8x8xf32>
    %cst_21 = arith.constant dense<0xFF800000> : vector<8xf32>
    %33 = vector.multi_reduction <maximumf>, %32, %cst_21 [1] : vector<8x8xf32> to vector<8xf32>
    %34 = vector.shape_cast %33 : vector<8xf32> to vector<8x1xf32>
    %35 = vector.broadcast %34 : vector<8x1xf32> to vector<8x8xf32>
    %36 = arith.subf %32, %35 : vector<8x8xf32>
    %37 = math.exp %36 : vector<8x8xf32>
    %cst_22 = arith.constant dense<0.000000e+00> : vector<8xf32>
    %38 = vector.multi_reduction <add>, %37, %cst_22 [1] : vector<8x8xf32> to vector<8xf32>
    %39 = vector.shape_cast %38 : vector<8xf32> to vector<8x1xf32>
    %40 = vector.broadcast %39 : vector<8x1xf32> to vector<8x8xf32>
    %41 = arith.divf %37, %40 : vector<8x8xf32>
    %cst_23 = arith.constant dense<0.000000e+00> : vector<8x16xf32>
    %42 = tpu.matmul %41, %31, %cst_23 {dimension_numbers = #tpu.dot_dimension_numbers<[1], [0], [0], [1], [0, 0, 1, 1], [], []>} : vector<8x8xf32>, vector<8x16xf32>, vector<8x16xf32> -> vector<8x16xf32>
    %c0_24 = arith.constant 0 : index
    %c0_25 = arith.constant 0 : index
    %c16 = arith.constant 16 : index
    %43 = vector.load %arg8[%c0_24, %c0_25, %c16] : memref<1x8x32xf32, #tpu.memory_space<vmem>>, vector<1x8x16xf32>
    %44 = vector.shape_cast %43 : vector<1x8x16xf32> to vector<8x16xf32>
    %45 = vector.shape_cast %42 : vector<8x16xf32> to vector<1x8x16xf32>
    tpu.vector_store %arg8[%c0_24, %c0_25, %c16], %45 {strides = array<i32>} : memref<1x8x32xf32, #tpu.memory_space<vmem>>, vector<1x8x16xf32>,
    %c1 = arith.constant 1 : index
    %c0_26 = arith.constant 0 : index
    %c0_27 = arith.constant 0 : index
    %c0_28 = arith.constant 0 : index
    %46 = vector.load %arg9[%c1, %c0_26, %c0_27, %c0_28] : memref<2x1x8x8xf32, #tpu.memory_space<vmem>>, vector<1x1x8x8xf32>
    %47 = vector.shape_cast %46 : vector<1x1x8x8xf32> to vector<8x8xf32>
    %48 = vector.shape_cast %41 : vector<8x8xf32> to vector<1x1x8x8xf32>
    tpu.vector_store %arg9[%c1, %c0_26, %c0_27, %c0_28], %48 {strides = array<i32>} : memref<2x1x8x8xf32, #tpu.memory_space<vmem>>, vector<1x1x8x8xf32>,
    return
  }
  func.func @transform_0(%arg0: i32, %arg1: i32) -> (i32, i32, i32) {
    %c0_i32 = arith.constant 0 : i32
    %c0_i32_0 = arith.constant 0 : i32
    return %arg0, %arg1, %c0_i32 : i32, i32, i32
  }
  func.func @transform_1(%arg0: i32, %arg1: i32) -> (i32, i32, i32) {
    %c0_i32 = arith.constant 0 : i32
    %c0_i32_0 = arith.constant 0 : i32
    %c0_i32_1 = arith.constant 0 : i32
    return %arg0, %c0_i32, %c0_i32_0 : i32, i32, i32
  }
  func.func @transform_2(%arg0: i32, %arg1: i32) -> (i32, i32) {
    %c0_i32 = arith.constant 0 : i32
    %c0_i32_0 = arith.constant 0 : i32
    %c0_i32_1 = arith.constant 0 : i32
    return %c0_i32, %c0_i32_0 : i32, i32
  }
  func.func @transform_3(%arg0: i32, %arg1: i32) -> (i32, i32) {
    %c0_i32 = arith.constant 0 : i32
    %c0_i32_0 = arith.constant 0 : i32
    %c0_i32_1 = arith.constant 0 : i32
    return %c0_i32, %c0_i32_0 : i32, i32
  }
  func.func @transform_4(%arg0: i32, %arg1: i32) -> (i32, i32) {
    %c0_i32 = arith.constant 0 : i32
    %c0_i32_0 = arith.constant 0 : i32
    %c0_i32_1 = arith.constant 0 : i32
    return %c0_i32, %c0_i32_0 : i32, i32
  }
  func.func @transform_5(%arg0: i32, %arg1: i32) -> (i32, i32) {
    %c0_i32 = arith.constant 0 : i32
    %c0_i32_0 = arith.constant 0 : i32
    %c0_i32_1 = arith.constant 0 : i32
    return %c0_i32, %c0_i32_0 : i32, i32
  }
  func.func @transform_6(%arg0: i32, %arg1: i32) -> (i32, i32, i32) {
    %c0_i32 = arith.constant 0 : i32
    %c0_i32_0 = arith.constant 0 : i32
    return %arg0, %arg1, %c0_i32 : i32, i32, i32
  }
  func.func @transform_7(%arg0: i32, %arg1: i32) -> (i32, i32, i32, i32) {
    %c0_i32 = arith.constant 0 : i32
    %c0_i32_0 = arith.constant 0 : i32
    %c0_i32_1 = arith.constant 0 : i32
    return %c0_i32, %arg0, %arg1, %c0_i32_0 : i32, i32, i32, i32
  }
}

</mosaic_0001>

<llo_original>
// kernel: tpu_custom_call.1
$region0: #{tpu_custom_call.1}
  #allocation0 [shape = 'u32[]', space=smem, size = 0x4, offset = 0x4, fixed_abs, tag = 'smem constant byte address 0x4 - core index']
  #allocation1 [shape = 'u32[144,128]{1,0:T(1,128)}', space=vmem, size = 0x12000, scoped, tag = 'internal scratch']
  #allocation2 [shape = 'f32[8,32]{1,0:T(8,128)}', space=vmem, size = 0x1000, scoped, tag = 'scratch operand']
  %s0 = inlined_call_operand.hbm [shape: f32[2,8,32], index: 0, kind: input, shape index: {}]
  %s1 = inlined_call_operand.hbm [shape: f32[2,8,32], index: 1, kind: input, shape index: {}]
  %s2 = inlined_call_operand.hbm [shape: f32[32,32], index: 2, kind: input, shape index: {}]
  %s3 = inlined_call_operand.vmem [shape: f32[1,32], index: 3, kind: input, shape index: {}]
  %s4 = inlined_call_operand.hbm [shape: f32[32,32], index: 4, kind: input, shape index: {}]
  %s5 = inlined_call_operand.vmem [shape: f32[1,32], index: 5, kind: input, shape index: {}]
  %s6 = inlined_call_operand.hbm [shape: f32[2,8,32], index: 6, kind: output, shape index: {0}]
  %s7 = inlined_call_operand.hbm [shape: f32[2,2,8,8], index: 7, kind: output, shape index: {1}]
  %8 = xla_tuple %s6, %s7
  %s9 = sld [smem:[#allocation0]]
  $region85: #{tpu_custom_call.1} parent=0
    _
  %s11 = ssub.s32 1, %s9
  %s12 = scalar_select 0, %s11, %s9
  $region1: #{tpu_custom_call.1} parent=0
    #allocation3 [shape = 'u8[8192]{0}', space=vmem, size = 0x2000, scoped, tag = 'input window, operand 0']
    #allocation4 [shape = 's32[2]{0}', space=sflag, size = 0x8, scoped, tag = 'scoped memory for tpu_custom_call.1']
    #allocation5 [shape = 's32[2]{0}', space=sflag, size = 0x8, scoped, tag = 'scoped memory for tpu_custom_call.1']
    #allocation6 [shape = 'u8[8192]{0}', space=vmem, size = 0x2000, scoped, tag = 'input window, operand 1']
    #allocation7 [shape = 's32[2]{0}', space=sflag, size = 0x8, scoped, tag = 'scoped memory for tpu_custom_call.1']
    #allocation8 [shape = 'u8[16384]{0}', space=vmem, size = 0x4000, scoped, tag = 'input window, operand 2, single buffered']
    #allocation9 [shape = 'u8[16384]{0}', space=vmem, size = 0x4000, scoped, tag = 'input window, operand 4, single buffered']
    #allocation10 [shape = 's32[1]{0}', space=sflag, size = 0x4, scoped, tag = 'scoped memory for tpu_custom_call.1']
    #allocation11 [shape = 'u8[8192]{0}', space=vmem, size = 0x2000, scoped, tag = 'output window, operand 0']
    #allocation12 [shape = 'u8[16384]{0}', space=vmem, size = 0x4000, scoped, tag = 'output window, operand 1']
    #allocation13 [shape = 's32[2]{0}', space=sflag, size = 0x8, scoped, tag = 'scoped memory for tpu_custom_call.1']
    %13 = vsyncpa [#allocation4], 0
    %s14 = scalar_lea.sflag [#allocation4], 1
    %15 = vsyncpa %s14, 0
    %16 = vsyncpa [#allocation7], 0
    %s17 = scalar_lea.sflag [#allocation7], 1
    %18 = vsyncpa %s17, 0
    %19 = vsyncpa [#allocation10], 0
    %20 = vsyncpa [#allocation5], 0
    %s21 = scalar_lea.sflag [#allocation5], 1
    %22 = vsyncpa %s21, 0
    %23 = vsyncpa [#allocation13], 0
    %s24 = scalar_lea.sflag [#allocation13], 1
    %25 = vsyncpa %s24, 0
    loop: start=0, step=1, limit=4
    $region2: #{tpu_custom_call.1} parent=1 // loop_pre_header
      _
    $region3: #{tpu_custom_call.1} parent=1 // loop_header
      %s27 = sphi 0, %s31
      %p28 = scmp.ge.s32.totalorder %s27, 4
      %s34 = sphi 0, %s46
      %s35 = sphi 0, %s42
      %s36 = sphi 0, %s34
      %s37 = sphi 0, %s35
      %s38 = sphi 0, %s36
      %s39 = sphi 0, %s37
      %s51 = sphi 0, %s53
      %s54 = sphi 0, %s51
      %s55 = sphi 0, %s54
      %s71 = sphi 0, %s55
      %s77 = sphi 0, %s79
      %s80 = sphi 0, %s77
      %s81 = sphi 0, %s80
      %s97 = sphi 0, %s81
      %s101 = sphi 0, %s101
      %s103 = sphi 0, %s101
      %s104 = sphi 0, %s103
      %s118 = sphi 0, %s104
      %s122 = sphi 0, %s122
      %s124 = sphi 0, %s122
      %s125 = sphi 0, %s124
      %s139 = sphi 0, %s125
      %s143 = sphi 0, %s143
      %s145 = sphi 0, %s143
      %s146 = sphi 0, %s145
      %s160 = sphi 0, %s146
      %s164 = sphi 0, %s164
      %s166 = sphi 0, %s164
      %s167 = sphi 0, %s166
      %s181 = sphi 0, %s167
      %s189 = sphi 0, %s191
      %s192 = sphi 0, %s189
      %s193 = sphi 0, %s192
      %s209 = sphi 0, %s193
      %s217 = sphi 0, %s219
      %s220 = sphi 0, %s217
      %s221 = sphi 0, %s220
      %s237 = sphi 0, %s221
    $region4: #{tpu_custom_call.1} parent=1 // loop_header_branch
      %30 = sbr.rel (%p28) target = $region8
    $region5: #{tpu_custom_call.1} parent=1 // loop_body
      %s32 = ssub.s32 %s27, 1
      %s33 = ssub.s32 %s27, 2
      %s40 = sadd.s32 1, %s35
      %p41 = scmp.ge.s32.totalorder %s40, 1
      %s42 = scalar_select %p41, 0, %s40
      %s43 = sadd.s32 1, %s34
      %s44 = scalar_select %p41, %s43, %s34
      %p45 = scmp.ge.s32.totalorder %s44, 2
      %s46 = scalar_select %p45, 0, %s44
      %s47 = ssub.s32 %s34, %s46
      %s48 = ssub.s32 %s35, %s42
      %s49 = sor.u32 %s47, %s48
      %p50 = scmp.eq.s32.totalorder %s49, 0
      %s52 = sadd.s32 %s51, 1
      %s53 = scalar_select %p50, %s51, %s52
      %p56 = pneg %p50
      %p57 = scmp.eq.s32.totalorder %s27, 1
      %p58 = por %p56, %p57
      %p59 = scmp.ne.s32.totalorder %s51, %s54
      %p60 = scmp.eq.s32.totalorder %s27, 0
      %p61 = por %p59, %p60
      %p62 = scmp.ne.s32.totalorder %s51, %s54
      %p63 = scmp.eq.s32.totalorder %s32, 1
      %p64 = por %p62, %p63
      %p65 = scmp.ne.s32.totalorder %s54, %s55
      %p66 = scmp.eq.s32.totalorder %s32, 0
      %p67 = por %p65, %p66
      %p68 = scmp.ne.s32.totalorder %s54, %s55
      %p69 = scmp.eq.s32.totalorder %s33, 1
      %p70 = por %p68, %p69
      %p72 = scmp.ne.s32.totalorder %s55, %s71
      %p73 = scmp.eq.s32.totalorder %s33, 0
      %p74 = por %p72, %p73
      %s75 = ssub.s32 %s34, %s46
      %p76 = scmp.eq.s32.totalorder %s75, 0
      %s78 = sadd.s32 %s77, 1
      %s79 = scalar_select %p76, %s77, %s78
      %p82 = pneg %p76
      %p83 = scmp.eq.s32.totalorder %s27, 1
      %p84 = por %p82, %p83
      %p85 = scmp.ne.s32.totalorder %s77, %s80
      %p86 = scmp.eq.s32.totalorder %s27, 0
      %p87 = por %p85, %p86
      %p88 = scmp.ne.s32.totalorder %s77, %s80
      %p89 = scmp.eq.s32.totalorder %s32, 1
      %p90 = por %p88, %p89
      %p91 = scmp.ne.s32.totalorder %s80, %s81
      %p92 = scmp.eq.s32.totalorder %s32, 0
      %p93 = por %p91, %p92
      %p94 = scmp.ne.s32.totalorder %s80, %s81
      %p95 = scmp.eq.s32.totalorder %s33, 1
      %p96 = por %p94, %p95
      %p98 = scmp.ne.s32.totalorder %s81, %s97
      %p99 = scmp.eq.s32.totalorder %s33, 0
      %p100 = por %p98, %p99
      %s102 = sadd.s32 %s101, 1
      %p105 = scmp.eq.s32.totalorder %s27, 1
      %p106 = scmp.ne.s32.totalorder %s101, %s103
      %p107 = scmp.eq.s32.totalorder %s27, 0
      %p108 = por %p106, %p107
      %p109 = scmp.ne.s32.totalorder %s101, %s103
      %p110 = scmp.eq.s32.totalorder %s32, 1
      %p111 = por %p109, %p110
      %p112 = scmp.ne.s32.totalorder %s103, %s104
      %p113 = scmp.eq.s32.totalorder %s32, 0
      %p114 = por %p112, %p113
      %p115 = scmp.ne.s32.totalorder %s103, %s104
      %p116 = scmp.eq.s32.totalorder %s33, 1
      %p117 = por %p115, %p116
      %p119 = scmp.ne.s32.totalorder %s104, %s118
      %p120 = scmp.eq.s32.totalorder %s33, 0
      %p121 = por %p119, %p120
      %s123 = sadd.s32 %s122, 1
      %p126 = scmp.eq.s32.totalorder %s27, 1
      %p127 = scmp.ne.s32.totalorder %s122, %s124
      %p128 = scmp.eq.s32.totalorder %s27, 0
      %p129 = por %p127, %p128
      %p130 = scmp.ne.s32.totalorder %s122, %s124
      %p131 = scmp.eq.s32.totalorder %s32, 1
      %p132 = por %p130, %p131
      %p133 = scmp.ne.s32.totalorder %s124, %s125
      %p134 = scmp.eq.s32.totalorder %s32, 0
      %p135 = por %p133, %p134
      %p136 = scmp.ne.s32.totalorder %s124, %s125
      %p137 = scmp.eq.s32.totalorder %s33, 1
      %p138 = por %p136, %p137
      %p140 = scmp.ne.s32.totalorder %s125, %s139
      %p141 = scmp.eq.s32.totalorder %s33, 0
      %p142 = por %p140, %p141
      %s144 = sadd.s32 %s143, 1
      %p147 = scmp.eq.s32.totalorder %s27, 1
      %p148 = scmp.ne.s32.totalorder %s143, %s145
      %p149 = scmp.eq.s32.totalorder %s27, 0
      %p150 = por %p148, %p149
      %p151 = scmp.ne.s32.totalorder %s143, %s145
      %p152 = scmp.eq.s32.totalorder %s32, 1
      %p153 = por %p151, %p152
      %p154 = scmp.ne.s32.totalorder %s145, %s146
      %p155 = scmp.eq.s32.totalorder %s32, 0
      %p156 = por %p154, %p155
      %p157 = scmp.ne.s32.totalorder %s145, %s146
      %p158 = scmp.eq.s32.totalorder %s33, 1
      %p159 = por %p157, %p158
      %p161 = scmp.ne.s32.totalorder %s146, %s160
      %p162 = scmp.eq.s32.totalorder %s33, 0
      %p163 = por %p161, %p162
      %s165 = sadd.s32 %s164, 1
      %p168 = scmp.eq.s32.totalorder %s27, 1
      %p169 = scmp.ne.s32.totalorder %s164, %s166
      %p170 = scmp.eq.s32.totalorder %s27, 0
      %p171 = por %p169, %p170
      %p172 = scmp.ne.s32.totalorder %s164, %s166
      %p173 = scmp.eq.s32.totalorder %s32, 1
      %p174 = por %p172, %p173
      %p175 = scmp.ne.s32.totalorder %s166, %s167
      %p176 = scmp.eq.s32.totalorder %s32, 0
      %p177 = por %p175, %p176
      %p178 = scmp.ne.s32.totalorder %s166, %s167
      %p179 = scmp.eq.s32.totalorder %s33, 1
      %p180 = por %p178, %p179
      %p182 = scmp.ne.s32.totalorder %s167, %s181
      %p183 = scmp.eq.s32.totalorder %s33, 0
      %p184 = por %p182, %p183
      %s185 = ssub.s32 %s34, %s46
      %s186 = ssub.s32 %s35, %s42
      %s187 = sor.u32 %s185, %s186
      %p188 = scmp.eq.s32.totalorder %s187, 0
      %s190 = sadd.s32 %s189, 1
      %s191 = scalar_select %p188, %s189, %s190
      %p194 = pneg %p188
      %p195 = scmp.eq.s32.totalorder %s27, 1
      %p196 = por %p194, %p195
      %p197 = scmp.ne.s32.totalorder %s189, %s192
      %p198 = scmp.eq.s32.totalorder %s27, 0
      %p199 = por %p197, %p198
      %p200 = scmp.ne.s32.totalorder %s189, %s192
      %p201 = scmp.eq.s32.totalorder %s32, 1
      %p202 = por %p200, %p201
      %p203 = scmp.ne.s32.totalorder %s192, %s193
      %p204 = scmp.eq.s32.totalorder %s32, 0
      %p205 = por %p203, %p204
      %p206 = scmp.ne.s32.totalorder %s192, %s193
      %p207 = scmp.eq.s32.totalorder %s33, 1
      %p208 = por %p206, %p207
      %p210 = scmp.ne.s32.totalorder %s193, %s209
      %p211 = scmp.eq.s32.totalorder %s33, 0
      %p212 = por %p210, %p211
      %s213 = ssub.s32 %s34, %s46
      %s214 = ssub.s32 %s35, %s42
      %s215 = sor.u32 %s213, %s214
      %p216 = scmp.eq.s32.totalorder %s215, 0
      %s218 = sadd.s32 %s217, 1
      %s219 = scalar_select %p216, %s217, %s218
      %p222 = pneg %p216
      %p223 = scmp.eq.s32.totalorder %s27, 1
      %p224 = por %p222, %p223
      %p225 = scmp.ne.s32.totalorder %s217, %s220
      %p226 = scmp.eq.s32.totalorder %s27, 0
      %p227 = por %p225, %p226
      %p228 = scmp.ne.s32.totalorder %s217, %s220
      %p229 = scmp.eq.s32.totalorder %s32, 1
      %p230 = por %p228, %p229
      %p231 = scmp.ne.s32.totalorder %s220, %s221
      %p232 = scmp.eq.s32.totalorder %s32, 0
      %p233 = por %p231, %p232
      %p234 = scmp.ne.s32.totalorder %s220, %s221
      %p235 = scmp.eq.s32.totalorder %s33, 1
      %p236 = por %p234, %p235
      %p238 = scmp.ne.s32.totalorder %s221, %s237
      %p239 = scmp.eq.s32.totalorder %s33, 0
      %p240 = por %p238, %p239
      %p241 = scmp.le.s32.totalorder 1, %s27
      %p242 = scmp.lt.s32.totalorder %s27, 3
      %p243 = pnand %p241, %p242
      %p244 = pneg %p243
      // Predicated region
      $region9: #{tpu_custom_call.1} parent=5 // pred_check
        _
      $region10: #{tpu_custom_call.1} parent=5 // pred_check_branch
        %246 = sbr.rel (%p243) target = $region12
      $region11: #{tpu_custom_call.1} parent=5 // pred_region
        %s247 = ssub.s32 %s27, 1
        // Predicated region
        $region13: #{tpu_custom_call.1} parent=11 // pred_check
          %p248 = pneg %p114
        $region14: #{tpu_custom_call.1} parent=11 // pred_check_branch
          %250 = sbr.rel (%p248) target = $region16
        $region15: #{tpu_custom_call.1} parent=11 // pred_region
          %s252 = ssub.s32 512, 512
          %253 = vsyncadd [#allocation7], %s252
          %s254 = sshll.u32 [#allocation8], 4
          %s255 = int_to_ptr.vmem [resolvable:$true] %s254
          %260 = dma.hbm_to_vmem [thread:$0]  %s2, 512, %s255, [#allocation7], 128, 128, 8
        $region16: #{tpu_custom_call.1} parent=11 // pred_fallthru
          _
        // Predicated region
        $region17: #{tpu_custom_call.1} parent=11 // pred_check
          %p261 = pneg %p135
        $region18: #{tpu_custom_call.1} parent=11 // pred_check_branch
          %263 = sbr.rel (%p261) target = $region20
        $region19: #{tpu_custom_call.1} parent=11 // pred_region
          _
        $region20: #{tpu_custom_call.1} parent=11 // pred_fallthru
          _
        // Predicated region
        $region21: #{tpu_custom_call.1} parent=11 // pred_check
          %p264 = pneg %p156
        $region22: #{tpu_custom_call.1} parent=11 // pred_check_branch
          %266 = sbr.rel (%p264) target = $region24
        $region23: #{tpu_custom_call.1} parent=11 // pred_region
          %s268 = ssub.s32 512, 512
          %269 = vsyncadd [#allocation10], %s268
          %s270 = sshll.u32 [#allocation9], 4
          %s271 = int_to_ptr.vmem [resolvable:$true] %s270
          %276 = dma.hbm_to_vmem [thread:$0]  %s4, 512, %s271, [#allocation10], 128, 128, 8
        $region24: #{tpu_custom_call.1} parent=11 // pred_fallthru
          _
        // Predicated region
        $region25: #{tpu_custom_call.1} parent=11 // pred_check
          %p277 = pneg %p177
        $region26: #{tpu_custom_call.1} parent=11 // pred_check_branch
          %279 = sbr.rel (%p277) target = $region28
        $region27: #{tpu_custom_call.1} parent=11 // pred_region
          _
        $region28: #{tpu_custom_call.1} parent=11 // pred_fallthru
          _
      $region12: #{tpu_custom_call.1} parent=5 // pred_fallthru
        _
      %p280 = scmp.lt.s32.totalorder %s27, 2
      // Predicated region
      $region29: #{tpu_custom_call.1} parent=5 // pred_check
        %p281 = pneg %p280
      $region30: #{tpu_custom_call.1} parent=5 // pred_check_branch
        %283 = sbr.rel (%p281) target = $region32
      $region31: #{tpu_custom_call.1} parent=5 // pred_region
        // Predicated region
        $region33: #{tpu_custom_call.1} parent=31 // pred_check
          %p284 = pneg %p61
        $region34: #{tpu_custom_call.1} parent=31 // pred_check_branch
          %286 = sbr.rel (%p284) target = $region36
        $region35: #{tpu_custom_call.1} parent=31 // pred_region
          %s287 = sand.u32 %s51, 1
          %s288 = scalar_lea.sflag [#allocation4], %s287
          %s289 = sand.u32 %s51, 1
          %s290 = smul.addr %s289, 8
          %s291 = scalar_lea.vmem [#allocation3], %s290
          %s293 = ssub.s32 128, 128
          %294 = vsyncadd %s288, %s293
          %s295 = sadd.s32 %s35, %s34
          %s296 = smul.addr %s295, 128
          %s297 = scalar_lea.hbm %s0, %s296
          %s299 = sshll.u32 %s291, 4
          %s300 = int_to_ptr.vmem [resolvable:$true] %s299
          %302 = dma.hbm_to_vmem [thread:$0]  %s297, 128, %s300, %s288
        $region36: #{tpu_custom_call.1} parent=31 // pred_fallthru
          _
        // Predicated region
        $region37: #{tpu_custom_call.1} parent=31 // pred_check
          %p303 = pneg %p87
        $region38: #{tpu_custom_call.1} parent=31 // pred_check_branch
          %305 = sbr.rel (%p303) target = $region40
        $region39: #{tpu_custom_call.1} parent=31 // pred_region
          %s306 = sand.u32 %s27, 1
          %s307 = scalar_lea.sflag [#allocation7], %s306
          %s308 = sand.u32 %s77, 1
          %s309 = smul.addr %s308, 8
          %s310 = scalar_lea.vmem [#allocation6], %s309
          %s312 = ssub.s32 128, 128
          %313 = vsyncadd %s307, %s312
          %s314 = smul.addr %s34, 128
          %s315 = scalar_lea.hbm %s1, %s314
          %s317 = sshll.u32 %s310, 4
          %s318 = int_to_ptr.vmem [resolvable:$true] %s317
          %320 = dma.hbm_to_vmem [thread:$0]  %s315, 128, %s318, %s307
        $region40: #{tpu_custom_call.1} parent=31 // pred_fallthru
          _
      $region32: #{tpu_custom_call.1} parent=5 // pred_fallthru
        _
      %p321 = scmp.le.s32.totalorder 1, %s27
      %p322 = scmp.lt.s32.totalorder %s27, 3
      %p323 = pnand %p321, %p322
      %p324 = pneg %p323
      // Predicated region
      $region41: #{tpu_custom_call.1} parent=5 // pred_check
        _
      $region42: #{tpu_custom_call.1} parent=5 // pred_check_branch
        %326 = sbr.rel (%p323) target = $region44
      $region43: #{tpu_custom_call.1} parent=5 // pred_region
        %s327 = ssub.s32 %s27, 1
        %s328 = sand.u32 %s54, 1
        %s329 = scalar_lea.sflag [#allocation4], %s328
        %s330 = sand.u32 %s54, 1
        %s331 = smul.addr %s330, 8
        %s332 = scalar_lea.vmem [#allocation3], %s331
        // Predicated region
        $region45: #{tpu_custom_call.1} parent=43 // pred_check
          %p333 = pneg %p67
        $region46: #{tpu_custom_call.1} parent=43 // pred_check_branch
          %335 = sbr.rel (%p333) target = $region48
        $region47: #{tpu_custom_call.1} parent=43 // pred_region
          %336 = dma.done %s329, 128
        $region48: #{tpu_custom_call.1} parent=43 // pred_fallthru
          _
        %s337 = sand.u32 %s32, 1
        %s338 = scalar_lea.sflag [#allocation7], %s337
        %s339 = sand.u32 %s80, 1
        %s340 = smul.addr %s339, 8
        %s341 = scalar_lea.vmem [#allocation6], %s340
        // Predicated region
        $region49: #{tpu_custom_call.1} parent=43 // pred_check
          %p342 = pneg %p93
        $region50: #{tpu_custom_call.1} parent=43 // pred_check_branch
          %344 = sbr.rel (%p342) target = $region52
        $region51: #{tpu_custom_call.1} parent=43 // pred_region
          %345 = dma.done %s338, 128
        $region52: #{tpu_custom_call.1} parent=43 // pred_fallthru
          _
        // Predicated region
        $region53: #{tpu_custom_call.1} parent=43 // pred_check
          %p346 = pneg %p114
        $region54: #{tpu_custom_call.1} parent=43 // pred_check_branch
          %348 = sbr.rel (%p346) target = $region56
        $region55: #{tpu_custom_call.1} parent=43 // pred_region
          %349 = dma.done [#allocation7], 512
        $region56: #{tpu_custom_call.1} parent=43 // pred_fallthru
          _
        // Predicated region
        $region57: #{tpu_custom_call.1} parent=43 // pred_check
          %p350 = pneg %p156
        $region58: #{tpu_custom_call.1} parent=43 // pred_check_branch
          %352 = sbr.rel (%p350) target = $region60
        $region59: #{tpu_custom_call.1} parent=43 // pred_region
          %353 = dma.done [#allocation10], 512
        $region60: #{tpu_custom_call.1} parent=43 // pred_fallthru
          _
        %s354 = sand.u32 %s54, 1
        %s355 = scalar_lea.sflag [#allocation4], %s354
        %s356 = sand.u32 %s54, 1
        %s357 = smul.addr %s356, 8
        %s358 = scalar_lea.vmem [#allocation3], %s357
        %p359 = pneg %p67
        %p360 = pneg %p64
        %s361 = sand.u32 %s32, 1
        %s362 = scalar_lea.sflag [#allocation7], %s361
        %s363 = sand.u32 %s80, 1
        %s364 = smul.addr %s363, 8
        %s365 = scalar_lea.vmem [#allocation6], %s364
        %p366 = pneg %p93
        %p367 = pneg %p90
        %p368 = pneg %p114
        %p369 = pneg %p111
        %p370 = pneg %p135
        %p371 = pneg %p132
        %p372 = pneg %p156
        %p373 = pneg %p153
        %p374 = pneg %p177
        %p375 = pneg %p174
        %p376 = pneg %p205
        %p377 = pneg %p202
        %s378 = sand.u32 %s192, 1
        %s379 = scalar_lea.sflag [#allocation5], %s378
        %s380 = sand.u32 %s192, 1
        %s381 = smul.addr %s380, 8
        %s382 = scalar_lea.vmem [#allocation11], %s381
        %p383 = pneg %p233
        %p384 = pneg %p230
        %s385 = sand.u32 %s220, 1
        %s386 = scalar_lea.sflag [#allocation13], %s385
        %s387 = sand.u32 %s220, 1
        %s388 = smul.addr %s387, 16
        %s389 = scalar_lea.vmem [#allocation12], %s388
        %p390 = scmp.eq.s32.totalorder %s37, 0
        // Predicated region
        $region61: #{tpu_custom_call.1} parent=43 // pred_check
          %p391 = pneg %p390
        $region62: #{tpu_custom_call.1} parent=43 // pred_check_branch
          %393 = sbr.rel (%p391) target = $region64
        $region63: #{tpu_custom_call.1} parent=43 // pred_region
          %v394 = vld [vmem:[%s341] sm:$0xff]
          %v395 = vld [vmem:[#allocation9] sm:$0xff]
          %v396 = vld [vmem:[#allocation9 + $0x8] sm:$0xff]
          %v397 = vld [vmem:[#allocation9 + $0x10] sm:$0xff]
          %v398 = vld [vmem:[#allocation9 + $0x18] sm:$0xff]
          %v399 = vld [vmem:[%s5] sm:$0x1]
          %v401 = vlaneseq
          %v402 = vshrl.u32 %v401, 7
          %v403 = vsub.s32 0, %v402
          %v404 = vrot.slane %v399, %v403
          %vm406 = vcmask 261120
          %v408 = vsel %vm406, %v394, 0
          %410 = vmatprep.subr.mxu0 0.0
          %411 = vmatpush1.msra.mxu0 %v395
          %412 = vmatprep.subr.mxu0 0.0
          %413 = vmatpush1.msra.mxu0 %v396
          %414 = vmatprep.subr.mxu0 0.0
          %415 = vmatpush1.msra.mxu0 %v397
          %416 = vmatprep.subr.mxu0 0.0
          %417 = vmatpush1.msra.mxu0 %v398
          %418 = vmatprep.subr.mxu0 0.0
          %419 = vmatpush1.msra.mxu0 0.0
          %420 = vmatprep.subr.mxu0 0.0
          %421 = vmatpush1.msra.mxu0 0.0
          %422 = vmatprep.subr.mxu0 0.0
          %423 = vmatpush1.msra.mxu0 0.0
          %424 = vmatprep.subr.mxu0 0.0
          %425 = vmatpush1.msra.mxu0 0.0
          %426 = vmatprep.subr.mxu0 0.0
          %427 = vmatpush1.msra.mxu0 0.0
          %428 = vmatprep.subr.mxu0 0.0
          %429 = vmatpush1.msra.mxu0 0.0
          %430 = vmatprep.subr.mxu0 0.0
          %431 = vmatpush1.msra.mxu0 0.0
          %432 = vmatprep.subr.mxu0 0.0
          %433 = vmatpush1.msra.mxu0 0.0
          %434 = vmatprep.subr.mxu0 0.0
          %435 = vmatpush1.msra.mxu0 0.0
          %436 = vmatprep.subr.mxu0 0.0
          %437 = vmatpush1.msra.mxu0 0.0
          %438 = vmatprep.subr.mxu0 0.0
          %439 = vmatpush1.msra.mxu0 0.0
          %440 = vmatprep.subr.mxu0 0.0
          %441 = vmatpush1.msra.mxu0 0.0
          %442 = vmatprep.subr.mxu0 0.0
          %443 = vmatpush1.msra.mxu0 0.0
          %444 = vmatprep.subr.mxu0 0.0
          %445 = vmatpush1.msra.mxu0 0.0
          %446 = vmatprep.subr.mxu0 0.0
          %447 = vmatpush1.msra.mxu0 0.0
          %448 = vmatprep.subr.mxu0 0.0
          %449 = vmatpush1.msra.mxu0 0.0
          %450 = vmatprep.subr.mxu0 0.0
          %451 = vmatpush1.msra.mxu0 0.0
          %452 = vmatprep.subr.mxu0 0.0
          %453 = vmatpush1.msra.mxu0 0.0
          %454 = vmatprep.subr.mxu0 0.0
          %455 = vmatpush1.msra.mxu0 0.0
          %456 = vmatprep.subr.mxu0 0.0
          %457 = vmatpush1.msra.mxu0 0.0
          %458 = vmatprep.subr.mxu0 0.0
          %459 = vmatpush1.msra.mxu0 0.0
          %460 = vmatprep.subr.mxu0 0.0
          %461 = vmatpush1.msra.mxu0 0.0
          %462 = vmatprep.subr.mxu0 0.0
          %463 = vmatpush1.msra.mxu0 0.0
          %464 = vmatprep.subr.mxu0 0.0
          %465 = vmatpush1.msra.mxu0 0.0
          %466 = vmatprep.subr.mxu0 0.0
          %467 = vmatpush1.msra.mxu0 0.0
          %468 = vmatprep.subr.mxu0 0.0
          %469 = vmatpush1.msra.mxu0 0.0
          %470 = vmatprep.subr.mxu0 0.0
          %471 = vmatpush1.msra.mxu0 0.0
          %472 = vmatprep.subr.mxu0 0.0
          %473 = vmatpush1.msra.mxu0 0.0
          %474 = vmatprep.mubr.f32.mxu0 0.0
          %475 = vmatmul.mubr.f32.gmra.mrb[0].mxu0 %v408
          %v476 = vpop.f32.mrb[0].mxu0
          %v477 = vadd.f32 %v404, %v476
          %v478 = vpop.f32.mrb[0].mxu0
          %479 = vdwg.mxu0
          %480 = vst.msk [vmem:[#allocation2] sm:$0xff] %vm406, %v477
        $region64: #{tpu_custom_call.1} parent=43 // pred_fallthru
          _
        %v481 = vld [vmem:[%s332] sm:$0xff]
        %v482 = vld [vmem:[#allocation8] sm:$0xff]
        %v483 = vld [vmem:[#allocation8 + $0x8] sm:$0xff]
        %v484 = vld [vmem:[#allocation8 + $0x10] sm:$0xff]
        %v485 = vld [vmem:[#allocation8 + $0x18] sm:$0xff]
        %v486 = vld [vmem:[%s3] sm:$0x1]
        %v488 = vlaneseq
        %v489 = vshrl.u32 %v488, 7
        %v490 = vsub.s32 0, %v489
        %v491 = vrot.slane %v486, %v490
        %vm493 = vcmask 261120
        %v495 = vsel %vm493, %v481, 0
        %497 = vmatprep.subr.mxu0 0.0
        %498 = vmatpush1.msra.mxu0 %v482
        %499 = vmatprep.subr.mxu0 0.0
        %500 = vmatpush1.msra.mxu0 %v483
        %501 = vmatprep.subr.mxu0 0.0
        %502 = vmatpush1.msra.mxu0 %v484
        %503 = vmatprep.subr.mxu0 0.0
        %504 = vmatpush1.msra.mxu0 %v485
        %505 = vmatprep.subr.mxu0 0.0
        %506 = vmatpush1.msra.mxu0 0.0
        %507 = vmatprep.subr.mxu0 0.0
        %508 = vmatpush1.msra.mxu0 0.0
        %509 = vmatprep.subr.mxu0 0.0
        %510 = vmatpush1.msra.mxu0 0.0
        %511 = vmatprep.subr.mxu0 0.0
        %512 = vmatpush1.msra.mxu0 0.0
        %513 = vmatprep.subr.mxu0 0.0
        %514 = vmatpush1.msra.mxu0 0.0
        %515 = vmatprep.subr.mxu0 0.0
        %516 = vmatpush1.msra.mxu0 0.0
        %517 = vmatprep.subr.mxu0 0.0
        %518 = vmatpush1.msra.mxu0 0.0
        %519 = vmatprep.subr.mxu0 0.0
        %520 = vmatpush1.msra.mxu0 0.0
        %521 = vmatprep.subr.mxu0 0.0
        %522 = vmatpush1.msra.mxu0 0.0
        %523 = vmatprep.subr.mxu0 0.0
        %524 = vmatpush1.msra.mxu0 0.0
        %525 = vmatprep.subr.mxu0 0.0
        %526 = vmatpush1.msra.mxu0 0.0
        %527 = vmatprep.subr.mxu0 0.0
        %528 = vmatpush1.msra.mxu0 0.0
        %529 = vmatprep.subr.mxu0 0.0
        %530 = vmatpush1.msra.mxu0 0.0
        %531 = vmatprep.subr.mxu0 0.0
        %532 = vmatpush1.msra.mxu0 0.0
        %533 = vmatprep.subr.mxu0 0.0
        %534 = vmatpush1.msra.mxu0 0.0
        %535 = vmatprep.subr.mxu0 0.0
        %536 = vmatpush1.msra.mxu0 0.0
        %537 = vmatprep.subr.mxu0 0.0
        %538 = vmatpush1.msra.mxu0 0.0
        %539 = vmatprep.subr.mxu0 0.0
        %540 = vmatpush1.msra.mxu0 0.0
        %541 = vmatprep.subr.mxu0 0.0
        %542 = vmatpush1.msra.mxu0 0.0
        %543 = vmatprep.subr.mxu0 0.0
        %544 = vmatpush1.msra.mxu0 0.0
        %545 = vmatprep.subr.mxu0 0.0
        %546 = vmatpush1.msra.mxu0 0.0
        %547 = vmatprep.subr.mxu0 0.0
        %548 = vmatpush1.msra.mxu0 0.0
        %549 = vmatprep.subr.mxu0 0.0
        %550 = vmatpush1.msra.mxu0 0.0
        %551 = vmatprep.subr.mxu0 0.0
        %552 = vmatpush1.msra.mxu0 0.0
        %553 = vmatprep.subr.mxu0 0.0
        %554 = vmatpush1.msra.mxu0 0.0
        %555 = vmatprep.subr.mxu0 0.0
        %556 = vmatpush1.msra.mxu0 0.0
        %557 = vmatprep.subr.mxu0 0.0
        %558 = vmatpush1.msra.mxu0 0.0
        %559 = vmatprep.subr.mxu0 0.0
        %560 = vmatpush1.msra.mxu0 0.0
        %561 = vmatprep.mubr.f32.mxu0 0.0
        %562 = vmatmul.mubr.f32.gmra.mrb[0].mxu0 %v495
        %v563 = vpop.f32.mrb[0].mxu0
        %v564 = vadd.f32 %v491, %v563
        %v565 = vpop.f32.mrb[0].mxu0
        %566 = vdwg.mxu0
        %v567 = vld [vmem:[#allocation2] sm:$0xff]
        %vm568 = vcmask 130048
        %v570 = vsel %vm568, %v564, 0
        %v573 = vsel %vm568, %v567, 0
        %575 = vmatprep.subr.mxu0 0.0
        %576 = vmatpush1.xpose.msra.mxu0 %v573
        %577 = vmatprep.subr.mxu0 0.0
        %578 = vmatpush1.xpose.msra.mxu0 0.0
        %579 = vmatprep.subr.mxu0 0.0
        %580 = vmatpush1.xpose.msra.mxu0 0.0
        %581 = vmatprep.subr.mxu0 0.0
        %582 = vmatpush1.xpose.msra.mxu0 0.0
        %583 = vmatprep.subr.mxu0 0.0
        %584 = vmatpush1.xpose.msra.mxu0 0.0
        %585 = vmatprep.subr.mxu0 0.0
        %586 = vmatpush1.xpose.msra.mxu0 0.0
        %587 = vmatprep.subr.mxu0 0.0
        %588 = vmatpush1.xpose.msra.mxu0 0.0
        %589 = vmatprep.subr.mxu0 0.0
        %590 = vmatpush1.xpose.msra.mxu0 0.0
        %591 = vmatprep.subr.mxu0 0.0
        %592 = vmatpush1.xpose.msra.mxu0 0.0
        %593 = vmatprep.subr.mxu0 0.0
        %594 = vmatpush1.xpose.msra.mxu0 0.0
        %595 = vmatprep.subr.mxu0 0.0
        %596 = vmatpush1.xpose.msra.mxu0 0.0
        %597 = vmatprep.subr.mxu0 0.0
        %598 = vmatpush1.xpose.msra.mxu0 0.0
        %599 = vmatprep.subr.mxu0 0.0
        %600 = vmatpush1.xpose.msra.mxu0 0.0
        %601 = vmatprep.subr.mxu0 0.0
        %602 = vmatpush1.xpose.msra.mxu0 0.0
        %603 = vmatprep.subr.mxu0 0.0
        %604 = vmatpush1.xpose.msra.mxu0 0.0
        %605 = vmatprep.subr.mxu0 0.0
        %606 = vmatpush1.xpose.msra.mxu0 0.0
        %607 = vmatprep.subr.mxu0 0.0
        %608 = vmatpush1.xpose.msra.mxu0 0.0
        %609 = vmatprep.subr.mxu0 0.0
        %610 = vmatpush1.xpose.msra.mxu0 0.0
        %611 = vmatprep.subr.mxu0 0.0
        %612 = vmatpush1.xpose.msra.mxu0 0.0
        %613 = vmatprep.subr.mxu0 0.0
        %614 = vmatpush1.xpose.msra.mxu0 0.0
        %615 = vmatprep.subr.mxu0 0.0
        %616 = vmatpush1.xpose.msra.mxu0 0.0
        %617 = vmatprep.subr.mxu0 0.0
        %618 = vmatpush1.xpose.msra.mxu0 0.0
        %619 = vmatprep.subr.mxu0 0.0
        %620 = vmatpush1.xpose.msra.mxu0 0.0
        %621 = vmatprep.subr.mxu0 0.0
        %622 = vmatpush1.xpose.msra.mxu0 0.0
        %623 = vmatprep.subr.mxu0 0.0
        %624 = vmatpush1.xpose.msra.mxu0 0.0
        %625 = vmatprep.subr.mxu0 0.0
        %626 = vmatpush1.xpose.msra.mxu0 0.0
        %627 = vmatprep.subr.mxu0 0.0
        %628 = vmatpush1.xpose.msra.mxu0 0.0
        %629 = vmatprep.subr.mxu0 0.0
        %630 = vmatpush1.xpose.msra.mxu0 0.0
        %631 = vmatprep.subr.mxu0 0.0
        %632 = vmatpush1.xpose.msra.mxu0 0.0
        %633 = vmatprep.subr.mxu0 0.0
        %634 = vmatpush1.xpose.msra.mxu0 0.0
        %635 = vmatprep.subr.mxu0 0.0
        %636 = vmatpush1.xpose.msra.mxu0 0.0
        %637 = vmatprep.subr.mxu0 0.0
        %638 = vmatpush1.xpose.msra.mxu0 0.0
        %639 = vmatprep.mubr.f32.mxu0 0.0
        %640 = vmatmul.mubr.f32.gmra.mrb[0].mxu0 %v570
        %v641 = vpop.f32.mrb[0].mxu0
        %v642 = vadd.f32 0.0, %v641
        %v643 = vpop.f32.mrb[0].mxu0
        %644 = vdwg.mxu0
        %vm645 = vcmask 64512
        %v646 = vsel %vm645, %v642, -inf
        %647 = vmax.xlane.f32.xlu0 %v646
        %v648 = vpop.xlane.xlu0 %647
        %v649 = vsub.f32 %v642, %v648
        %v650 = vmul.f32 %v649, 1.442695
        %v651 = vpow.pop %v650
        %v652 = vsel %vm645, %v651, 0.0
        %653 = vadd.xlane.f32.xlu0 %v652
        %v654 = vpop.xlane.xlu0 %653
        %v655 = vrcp.pop %v654
        %v656 = vmul.f32 %v651, %v655
        %v658 = vsel %vm645, %v656, 0
        %660 = vmatprep.subr.mxu0 0.0
        %661 = vmatpush1.msra.mxu0 %v567
        %662 = vmatprep.subr.mxu0 0.0
        %663 = vmatpush1.msra.mxu0 0.0
        %664 = vmatprep.subr.mxu0 0.0
        %665 = vmatpush1.msra.mxu0 0.0
        %666 = vmatprep.subr.mxu0 0.0
        %667 = vmatpush1.msra.mxu0 0.0
        %668 = vmatprep.subr.mxu0 0.0
        %669 = vmatpush1.msra.mxu0 0.0
        %670 = vmatprep.subr.mxu0 0.0
        %671 = vmatpush1.msra.mxu0 0.0
        %672 = vmatprep.subr.mxu0 0.0
        %673 = vmatpush1.msra.mxu0 0.0
        %674 = vmatprep.subr.mxu0 0.0
        %675 = vmatpush1.msra.mxu0 0.0
        %676 = vmatprep.subr.mxu0 0.0
        %677 = vmatpush1.msra.mxu0 0.0
        %678 = vmatprep.subr.mxu0 0.0
        %679 = vmatpush1.msra.mxu0 0.0
        %680 = vmatprep.subr.mxu0 0.0
        %681 = vmatpush1.msra.mxu0 0.0
        %682 = vmatprep.subr.mxu0 0.0
        %683 = vmatpush1.msra.mxu0 0.0
        %684 = vmatprep.subr.mxu0 0.0
        %685 = vmatpush1.msra.mxu0 0.0
        %686 = vmatprep.subr.mxu0 0.0
        %687 = vmatpush1.msra.mxu0 0.0
        %688 = vmatprep.subr.mxu0 0.0
        %689 = vmatpush1.msra.mxu0 0.0
        %690 = vmatprep.subr.mxu0 0.0
        %691 = vmatpush1.msra.mxu0 0.0
        %692 = vmatprep.subr.mxu0 0.0
        %693 = vmatpush1.msra.mxu0 0.0
        %694 = vmatprep.subr.mxu0 0.0
        %695 = vmatpush1.msra.mxu0 0.0
        %696 = vmatprep.subr.mxu0 0.0
        %697 = vmatpush1.msra.mxu0 0.0
        %698 = vmatprep.subr.mxu0 0.0
        %699 = vmatpush1.msra.mxu0 0.0
        %700 = vmatprep.subr.mxu0 0.0
        %701 = vmatpush1.msra.mxu0 0.0
        %702 = vmatprep.subr.mxu0 0.0
        %703 = vmatpush1.msra.mxu0 0.0
        %704 = vmatprep.subr.mxu0 0.0
        %705 = vmatpush1.msra.mxu0 0.0
        %706 = vmatprep.subr.mxu0 0.0
        %707 = vmatpush1.msra.mxu0 0.0
        %708 = vmatprep.subr.mxu0 0.0
        %709 = vmatpush1.msra.mxu0 0.0
        %710 = vmatprep.subr.mxu0 0.0
        %711 = vmatpush1.msra.mxu0 0.0
        %712 = vmatprep.subr.mxu0 0.0
        %713 = vmatpush1.msra.mxu0 0.0
        %714 = vmatprep.subr.mxu0 0.0
        %715 = vmatpush1.msra.mxu0 0.0
        %716 = vmatprep.subr.mxu0 0.0
        %717 = vmatpush1.msra.mxu0 0.0
        %718 = vmatprep.subr.mxu0 0.0
        %719 = vmatpush1.msra.mxu0 0.0
        %720 = vmatprep.subr.mxu0 0.0
        %721 = vmatpush1.msra.mxu0 0.0
        %722 = vmatprep.subr.mxu0 0.0
        %723 = vmatpush1.msra.mxu0 0.0
        %724 = vmatprep.mubr.f32.mxu0 0.0
        %725 = vmatmul.mubr.f32.gmra.mrb[0].mxu0 %v658
        %v726 = vpop.f32.mrb[0].mxu0
        %v727 = vadd.f32 0.0, %v726
        %v728 = vpop.f32.mrb[0].mxu0
        %729 = vdwg.mxu0
        %730 = vst.msk [vmem:[%s382] sm:$0xff] %vm568, %v727
        %731 = vst.msk [vmem:[%s389] sm:$0xff] %vm645, %v656
        %732 = vrot.lane.b32.xlu0 %v564, 112
        %v733 = vpop.permute.xlu0 %732
        %734 = vrot.lane.b32.xlu0 %v567, 112
        %v735 = vpop.permute.xlu0 %734
        %v736 = vsel %vm568, %v733, 0
        %v738 = vsel %vm568, %v735, 0
        %740 = vmatprep.subr.mxu0 0.0
        %741 = vmatpush1.xpose.msra.mxu0 %v738
        %742 = vmatprep.subr.mxu0 0.0
        %743 = vmatpush1.xpose.msra.mxu0 0.0
        %744 = vmatprep.subr.mxu0 0.0
        %745 = vmatpush1.xpose.msra.mxu0 0.0
        %746 = vmatprep.subr.mxu0 0.0
        %747 = vmatpush1.xpose.msra.mxu0 0.0
        %748 = vmatprep.subr.mxu0 0.0
        %749 = vmatpush1.xpose.msra.mxu0 0.0
        %750 = vmatprep.subr.mxu0 0.0
        %751 = vmatpush1.xpose.msra.mxu0 0.0
        %752 = vmatprep.subr.mxu0 0.0
        %753 = vmatpush1.xpose.msra.mxu0 0.0
        %754 = vmatprep.subr.mxu0 0.0
        %755 = vmatpush1.xpose.msra.mxu0 0.0
        %756 = vmatprep.subr.mxu0 0.0
        %757 = vmatpush1.xpose.msra.mxu0 0.0
        %758 = vmatprep.subr.mxu0 0.0
        %759 = vmatpush1.xpose.msra.mxu0 0.0
        %760 = vmatprep.subr.mxu0 0.0
        %761 = vmatpush1.xpose.msra.mxu0 0.0
        %762 = vmatprep.subr.mxu0 0.0
        %763 = vmatpush1.xpose.msra.mxu0 0.0
        %764 = vmatprep.subr.mxu0 0.0
        %765 = vmatpush1.xpose.msra.mxu0 0.0
        %766 = vmatprep.subr.mxu0 0.0
        %767 = vmatpush1.xpose.msra.mxu0 0.0
        %768 = vmatprep.subr.mxu0 0.0
        %769 = vmatpush1.xpose.msra.mxu0 0.0
        %770 = vmatprep.subr.mxu0 0.0
        %771 = vmatpush1.xpose.msra.mxu0 0.0
        %772 = vmatprep.subr.mxu0 0.0
        %773 = vmatpush1.xpose.msra.mxu0 0.0
        %774 = vmatprep.subr.mxu0 0.0
        %775 = vmatpush1.xpose.msra.mxu0 0.0
        %776 = vmatprep.subr.mxu0 0.0
        %777 = vmatpush1.xpose.msra.mxu0 0.0
        %778 = vmatprep.subr.mxu0 0.0
        %779 = vmatpush1.xpose.msra.mxu0 0.0
        %780 = vmatprep.subr.mxu0 0.0
        %781 = vmatpush1.xpose.msra.mxu0 0.0
        %782 = vmatprep.subr.mxu0 0.0
        %783 = vmatpush1.xpose.msra.mxu0 0.0
        %784 = vmatprep.subr.mxu0 0.0
        %785 = vmatpush1.xpose.msra.mxu0 0.0
        %786 = vmatprep.subr.mxu0 0.0
        %787 = vmatpush1.xpose.msra.mxu0 0.0
        %788 = vmatprep.subr.mxu0 0.0
        %789 = vmatpush1.xpose.msra.mxu0 0.0
        %790 = vmatprep.subr.mxu0 0.0
        %791 = vmatpush1.xpose.msra.mxu0 0.0
        %792 = vmatprep.subr.mxu0 0.0
        %793 = vmatpush1.xpose.msra.mxu0 0.0
        %794 = vmatprep.subr.mxu0 0.0
        %795 = vmatpush1.xpose.msra.mxu0 0.0
        %796 = vmatprep.subr.mxu0 0.0
        %797 = vmatpush1.xpose.msra.mxu0 0.0
        %798 = vmatprep.subr.mxu0 0.0
        %799 = vmatpush1.xpose.msra.mxu0 0.0
        %800 = vmatprep.subr.mxu0 0.0
        %801 = vmatpush1.xpose.msra.mxu0 0.0
        %802 = vmatprep.subr.mxu0 0.0
        %803 = vmatpush1.xpose.msra.mxu0 0.0
        %804 = vmatprep.mubr.f32.mxu0 0.0
        %805 = vmatmul.mubr.f32.gmra.mrb[0].mxu0 %v736
        %v806 = vpop.f32.mrb[0].mxu0
        %v807 = vadd.f32 0.0, %v806
        %v808 = vpop.f32.mrb[0].mxu0
        %809 = vdwg.mxu0
        %v810 = vsel %vm645, %v807, -inf
        %811 = vmax.xlane.f32.xlu0 %v810
        %v812 = vpop.xlane.xlu0 %811
        %v813 = vsub.f32 %v807, %v812
        %v814 = vmul.f32 %v813, 1.442695
        %v815 = vpow.pop %v814
        %v816 = vsel %vm645, %v815, 0.0
        %817 = vadd.xlane.f32.xlu0 %v816
        %v818 = vpop.xlane.xlu0 %817
        %v819 = vrcp.pop %v818
        %v820 = vmul.f32 %v815, %v819
        %v823 = vsel %vm645, %v820, 0
        %825 = vmatprep.subr.mxu0 0.0
        %826 = vmatpush1.msra.mxu0 %v735
        %827 = vmatprep.subr.mxu0 0.0
        %828 = vmatpush1.msra.mxu0 0.0
        %829 = vmatprep.subr.mxu0 0.0
        %830 = vmatpush1.msra.mxu0 0.0
        %831 = vmatprep.subr.mxu0 0.0
        %832 = vmatpush1.msra.mxu0 0.0
        %833 = vmatprep.subr.mxu0 0.0
        %834 = vmatpush1.msra.mxu0 0.0
        %835 = vmatprep.subr.mxu0 0.0
        %836 = vmatpush1.msra.mxu0 0.0
        %837 = vmatprep.subr.mxu0 0.0
        %838 = vmatpush1.msra.mxu0 0.0
        %839 = vmatprep.subr.mxu0 0.0
        %840 = vmatpush1.msra.mxu0 0.0
        %841 = vmatprep.subr.mxu0 0.0
        %842 = vmatpush1.msra.mxu0 0.0
        %843 = vmatprep.subr.mxu0 0.0
        %844 = vmatpush1.msra.mxu0 0.0
        %845 = vmatprep.subr.mxu0 0.0
        %846 = vmatpush1.msra.mxu0 0.0
        %847 = vmatprep.subr.mxu0 0.0
        %848 = vmatpush1.msra.mxu0 0.0
        %849 = vmatprep.subr.mxu0 0.0
        %850 = vmatpush1.msra.mxu0 0.0
        %851 = vmatprep.subr.mxu0 0.0
        %852 = vmatpush1.msra.mxu0 0.0
        %853 = vmatprep.subr.mxu0 0.0
        %854 = vmatpush1.msra.mxu0 0.0
        %855 = vmatprep.subr.mxu0 0.0
        %856 = vmatpush1.msra.mxu0 0.0
        %857 = vmatprep.subr.mxu0 0.0
        %858 = vmatpush1.msra.mxu0 0.0
        %859 = vmatprep.subr.mxu0 0.0
        %860 = vmatpush1.msra.mxu0 0.0
        %861 = vmatprep.subr.mxu0 0.0
        %862 = vmatpush1.msra.mxu0 0.0
        %863 = vmatprep.subr.mxu0 0.0
        %864 = vmatpush1.msra.mxu0 0.0
        %865 = vmatprep.subr.mxu0 0.0
        %866 = vmatpush1.msra.mxu0 0.0
        %867 = vmatprep.subr.mxu0 0.0
        %868 = vmatpush1.msra.mxu0 0.0
        %869 = vmatprep.subr.mxu0 0.0
        %870 = vmatpush1.msra.mxu0 0.0
        %871 = vmatprep.subr.mxu0 0.0
        %872 = vmatpush1.msra.mxu0 0.0
        %873 = vmatprep.subr.mxu0 0.0
        %874 = vmatpush1.msra.mxu0 0.0
        %875 = vmatprep.subr.mxu0 0.0
        %876 = vmatpush1.msra.mxu0 0.0
        %877 = vmatprep.subr.mxu0 0.0
        %878 = vmatpush1.msra.mxu0 0.0
        %879 = vmatprep.subr.mxu0 0.0
        %880 = vmatpush1.msra.mxu0 0.0
        %881 = vmatprep.subr.mxu0 0.0
        %882 = vmatpush1.msra.mxu0 0.0
        %883 = vmatprep.subr.mxu0 0.0
        %884 = vmatpush1.msra.mxu0 0.0
        %885 = vmatprep.subr.mxu0 0.0
        %886 = vmatpush1.msra.mxu0 0.0
        %887 = vmatprep.subr.mxu0 0.0
        %888 = vmatpush1.msra.mxu0 0.0
        %889 = vmatprep.mubr.f32.mxu0 0.0
        %890 = vmatmul.mubr.f32.gmra.mrb[0].mxu0 %v823
        %v891 = vpop.f32.mrb[0].mxu0
        %v892 = vadd.f32 0.0, %v891
        %v893 = vpop.f32.mrb[0].mxu0
        %894 = vdwg.mxu0
        %896 = vrot.lane.b32.xlu0 %v892, 16
        %v897 = vpop.permute.xlu0 %896
        %vm899 = vcmask 261248
        %900 = vst.msk [vmem:[%s382] sm:$0xff] %vm899, %v897
        %s901 = scalar_lea.vmem %s389, 8 [#allocation12]
        %902 = vst.msk [vmem:[%s901] sm:$0xff] %vm645, %v820
        %s903 = sand.u32 %s192, 1
        %s904 = scalar_lea.sflag [#allocation5], %s903
        %s905 = sand.u32 %s192, 1
        %s906 = smul.addr %s905, 8
        %s907 = scalar_lea.vmem [#allocation11], %s906
        %s908 = sand.u32 %s220, 1
        %s909 = scalar_lea.sflag [#allocation13], %s908
        %s910 = sand.u32 %s220, 1
        %s911 = smul.addr %s910, 16
        %s912 = scalar_lea.vmem [#allocation12], %s911
        // Predicated region
        $region65: #{tpu_custom_call.1} parent=43 // pred_check
          %p913 = pneg %p202
        $region66: #{tpu_custom_call.1} parent=43 // pred_check_branch
          %915 = sbr.rel (%p913) target = $region68
        $region67: #{tpu_custom_call.1} parent=43 // pred_region
          %s917 = ssub.s32 128, 128
          %918 = vsyncadd %s904, %s917
          %s919 = sadd.s32 %s37, %s36
          %s920 = smul.addr %s919, 128
          %s921 = scalar_lea.hbm %s6, %s920
          %s923 = sshll.u32 %s907, 4
          %s924 = int_to_ptr.vmem [resolvable:$true] %s923
          %926 = dma.vmem_to_hbm [thread:$0]  %s924, 128, %s921, %s904
        $region68: #{tpu_custom_call.1} parent=43 // pred_fallthru
          _
        // Predicated region
        $region69: #{tpu_custom_call.1} parent=43 // pred_check
          %p927 = pneg %p230
        $region70: #{tpu_custom_call.1} parent=43 // pred_check_branch
          %929 = sbr.rel (%p927) target = $region72
        $region71: #{tpu_custom_call.1} parent=43 // pred_region
          %s931 = ssub.s32 256, 256
          %932 = vsyncadd %s909, %s931
          %s933 = sadd.s32 %s37, %s36
          %s934 = smul.addr %s933, 128
          %s935 = scalar_lea.hbm %s7, %s934
          %s936 = sshll.u32 %s912, 4
          %s937 = int_to_ptr.vmem [resolvable:$true] %s936
          %942 = dma.vmem_to_hbm [thread:$0]  %s937, 256, %s935, %s909, 128, 256, 8
        $region72: #{tpu_custom_call.1} parent=43 // pred_fallthru
          _
      $region44: #{tpu_custom_call.1} parent=5 // pred_fallthru
        _
      %p943 = scmp.le.s32.totalorder 2, %s27
      // Predicated region
      $region73: #{tpu_custom_call.1} parent=5 // pred_check
        %p944 = pneg %p943
      $region74: #{tpu_custom_call.1} parent=5 // pred_check_branch
        %946 = sbr.rel (%p944) target = $region76
      $region75: #{tpu_custom_call.1} parent=5 // pred_region
        %s947 = ssub.s32 %s27, 2
        // Predicated region
        $region77: #{tpu_custom_call.1} parent=75 // pred_check
          %p948 = pneg %p208
        $region78: #{tpu_custom_call.1} parent=75 // pred_check_branch
          %950 = sbr.rel (%p948) target = $region80
        $region79: #{tpu_custom_call.1} parent=75 // pred_region
          %s951 = sand.u32 %s193, 1
          %s952 = scalar_lea.sflag [#allocation5], %s951
          %s953 = sand.u32 %s193, 1
          %s954 = smul.addr %s953, 8
          %s955 = scalar_lea.vmem [#allocation11], %s954
          %956 = dma.done %s952, 128
        $region80: #{tpu_custom_call.1} parent=75 // pred_fallthru
          _
        // Predicated region
        $region81: #{tpu_custom_call.1} parent=75 // pred_check
          %p957 = pneg %p236
        $region82: #{tpu_custom_call.1} parent=75 // pred_check_branch
          %959 = sbr.rel (%p957) target = $region84
        $region83: #{tpu_custom_call.1} parent=75 // pred_region
          %s960 = sand.u32 %s221, 1
          %s961 = scalar_lea.sflag [#allocation13], %s960
          %s962 = sand.u32 %s221, 1
          %s963 = smul.addr %s962, 16
          %s964 = scalar_lea.vmem [#allocation12], %s963
          %965 = dma.done %s961, 256
        $region84: #{tpu_custom_call.1} parent=75 // pred_fallthru
          _
      $region76: #{tpu_custom_call.1} parent=5 // pred_fallthru
        _
    $region6: #{tpu_custom_call.1} parent=1 // loop_footer
      %s31 = sadd.s32 1, %s27
    $region7: #{tpu_custom_call.1} parent=1 // loop_footer_branch
      %26 = sbr.rel target = $region3
    $region8: #{tpu_custom_call.1} parent=1 // loop_exit
      _
    %966 = vsyncpa [#allocation4], 1
    %s967 = scalar_lea.sflag [#allocation4], 1
    %968 = vsyncpa %s967, 1
    %969 = vsyncpa [#allocation7], 1
    %s970 = scalar_lea.sflag [#allocation7], 1
    %971 = vsyncpa %s970, 1
    %972 = vsyncpa [#allocation10], 1
    %973 = vsyncpa [#allocation5], 1
    %s974 = scalar_lea.sflag [#allocation5], 1
    %975 = vsyncpa %s974, 1
    %976 = vsyncpa [#allocation13], 1
    %s977 = scalar_lea.sflag [#allocation13], 1
    %978 = vsyncpa %s977, 1

</llo_original>
